<compile_context>
chip_gen: v5e
topology: v5e:2x2
jax: 0.10.0
libtpu: 0.0.40
codegen_flags: <defaults>
</compile_context>

<pallas_src>
import functools

import jax
import jax.numpy as jnp
from jax.experimental import pallas as pl
from jax.experimental.pallas import tpu as pltpu

LEAKY_ALPHA = 0.2          # GraphAttentionLayer(alpha=0.2)
FUSED_BN_LIMIT = 512       # at or below this, run the whole forward in one VMEM-resident call
FLASH_TILE = 512           # tm = tk for the flash GAT kernel (also the row-pad quantum)
ADD_ATTN_SLAB = 256        # max batch rows per additive-attention grid step


def _round_up(x, m):
    return ((x + m - 1) // m) * m


def _slab(b, pref=ADD_ATTN_SLAB):
    """Largest legal batch slab: full extent if small, else a multiple-of-8 divisor."""
    if b <= pref:
        return b
    for t in range(pref, 7, -8):
        if b % t == 0:
            return t
    # TODO(synk): pad + mask the batch axis instead of a full-extent fallback for huge
    # batch sizes that have no multiple-of-8 divisor <= ADD_ATTN_SLAB.
    return b


def _vmem_limit(need_bytes):
    """Generation-aware scoped-VMEM request: >= 32 MiB, <= 3/4 of physical VMEM."""
    try:
        cap = int(pltpu.get_tpu_info().vmem_capacity_bytes) * 3 // 4  # v7x: 48 MiB, v5e/v6e: 96 MiB
    except Exception:
        cap = 48 * 1024 * 1024
    return int(max(32 * 1024 * 1024, min(cap, need_bytes)))


# --------------------------------------------------------------------------
# Shared AdditiveAttention block (used by both the fused and standalone kernels).
# --------------------------------------------------------------------------
def _additive_attention_block(x3, lw, lb, qvt):
    """AdditiveAttention forward on a VMEM-resident (b, n, d) block -> (b, d)."""
    b, n, d = x3.shape
    q = lw.shape[1]
    # One dense matmul over all b*n rows (no broadcast_to / batched einsum).
    temp = jnp.tanh(
        jnp.dot(x3.reshape(b * n, d), lw, preferred_element_type=jnp.float32) + lb)
    scores = jnp.sum(temp.reshape(b, n, q) * qvt, axis=2, keepdims=True)  # (b, n, 1)
    m = jnp.max(scores, axis=1, keepdims=True)
    p = jnp.exp(scores - m)
    w = p * pl.reciprocal(jnp.sum(p, axis=1, keepdims=True), approx=True)
    return jnp.sum(x3 * w, axis=1)                                        # (b, d)


# --------------------------------------------------------------------------
# Fused small-shape kernel: whole UserEncoder forward in one VMEM-resident call.
# --------------------------------------------------------------------------
def fused_user_encoder_kernel(h_ref, w_ref, a1_ref, a2t_ref, lw_ref, lb_ref,
                              qvt_ref, o_ref, *, b, n):
    # --- GraphAttentionLayer (dense all-ones adjacency => the -9e15 mask is a no-op) --
    wh = jnp.dot(h_ref[...], w_ref[...], preferred_element_type=jnp.float32)   # (BN, D)
    s1 = jnp.dot(wh, a1_ref[...], preferred_element_type=jnp.float32)          # (BN, 1)
    s2t = jax.lax.dot_general(a2t_ref[...], wh, (((1,), (1,)), ((), ())),
                              preferred_element_type=jnp.float32)              # (1, BN)
    e = s1 + s2t
    e = jnp.maximum(e, LEAKY_ALPHA * e)                                        # LeakyReLU
    m = jnp.max(e, axis=1, keepdims=True)
    p = jnp.exp(e - m)
    attn = p * pl.reciprocal(jnp.sum(p, axis=1, keepdims=True), approx=True)
    hp = jnp.dot(attn, wh, preferred_element_type=jnp.float32)                 # (BN, D)
    gat = jnp.where(hp > 0, hp, jnp.exp(hp) - 1.0)                             # ELU(1)
    # --- AdditiveAttention ---
    o_ref[...] = _additive_attention_block(
        gat.reshape(b, n, gat.shape[1]), lw_ref[...], lb_ref[...], qvt_ref[...])


def _fused_forward(h, W, a1, a2t, lw, lb, qvt, b, n):
    bn, d = h.shape
    q = lw.shape[1]
    need = 4 * (4 * bn * bn + 10 * bn * max(d, q) + d * d)
    return pl.pallas_call(
        functools.partial(fused_user_encoder_kernel, b=b, n=n),
        out_shape=jax.ShapeDtypeStruct((b, d), jnp.float32),
        grid=(1,),
        in_specs=[pl.BlockSpec((bn, d), lambda i: (0, 0)),
                  pl.BlockSpec((d, d), lambda i: (0, 0)),
                  pl.BlockSpec((d, 1), lambda i: (0, 0)),
                  pl.BlockSpec((1, d), lambda i: (0, 0)),
                  pl.BlockSpec((d, q), lambda i: (0, 0)),
                  pl.BlockSpec((1, q), lambda i: (0, 0)),
                  pl.BlockSpec((1, q), lambda i: (0, 0))],
        out_specs=pl.BlockSpec((b, d), lambda i: (0, 0)),
        compiler_params=pltpu.CompilerParams(
            dimension_semantics=("arbitrary",),
            vmem_limit_bytes=_vmem_limit(need)),
    )(h, W, a1, a2t, lw, lb, qvt)


# --------------------------------------------------------------------------
# Large-shape path, kernel 1: Wh = h @ W (row-tiled).
# --------------------------------------------------------------------------
def gat_project_kernel(h_ref, w_ref, wh_ref):
    wh_ref[...] = jnp.dot(h_ref[...], w_ref[...], preferred_element_type=jnp.float32)


# --------------------------------------------------------------------------
# Large-shape path, kernel 2: flash-style GAT attention.  Row blocks "parallel",
# column blocks are the "arbitrary" online-softmax reduction axis.  Score columns
# s1/s2 are computed in-kernel from the Wh tiles; padded columns are masked.
# --------------------------------------------------------------------------
def gat_flash_kernel(whr_ref, whc_ref, a1_ref, a2t_ref, o_ref,
                     m_sc, l_sc, s1_sc, acc_sc, *, bn):
    k = pl.program_id(1)
    tk = whc_ref.shape[0]

    @pl.when(k == 0)
    def _():
        m_sc[...] = jnp.full_like(m_sc, -jnp.inf)
        l_sc[...] = jnp.zeros_like(l_sc)
        acc_sc[...] = jnp.zeros_like(acc_sc)
        # Row scores Wh1_i: once per row block (row tile is not re-DMA'd across k).
        s1_sc[...] = jnp.dot(whr_ref[...], a1_ref[...],
                             preferred_element_type=jnp.float32)

    whc = whc_ref[...]                                                     # (tk, D)
    # Column scores Wh2_j as a (1, tk) row: a2^T contracted against Wh_col^T.
    s2t = jax.lax.dot_general(a2t_ref[...], whc, (((1,), (1,)), ((), ())),
                              preferred_element_type=jnp.float32)
    e = s1_sc[...] + s2t                                                   # (tm, tk)
    e = jnp.maximum(e, LEAKY_ALPHA * e)                                    # LeakyReLU

    if bn % tk:  # static: only emitted when BN was padded -> mask padded columns
        col = k * tk + jax.lax.broadcasted_iota(jnp.int32, (1, tk), 1)
        e = jnp.where(col < bn, e, -jnp.inf)

    m_new = jnp.maximum(m_sc[...], jnp.max(e, axis=1, keepdims=True))
    alpha = jnp.exp(m_sc[...] - m_new)
    p = jnp.exp(e - m_new)                                                 # (tm, tk)
    l_sc[...] = alpha * l_sc[...] + jnp.sum(p, axis=1, keepdims=True)
    acc_sc[...] = alpha * acc_sc[...] + jnp.dot(
        p.astype(jnp.bfloat16), whc.astype(jnp.bfloat16),
        preferred_element_type=jnp.float32)                               # (tm, D)
    m_sc[...] = m_new

    @pl.when(k == pl.num_programs(1) - 1)
    def _():
        hp = acc_sc[...] * pl.reciprocal(l_sc[...], approx=True)
        o_ref[...] = jnp.where(hp > 0, hp, jnp.exp(hp) - 1.0)             # ELU(1)


def _gat_forward_large(h, W, a1, a2t):
    bn, d = h.shape
    tm = tk = FLASH_TILE
    bn_pad = _round_up(bn, tm)
    if bn_pad != bn:
        h = jnp.pad(h, ((0, bn_pad - bn), (0, 0)))    # zero rows -> finite scores, masked cols

    wh = pl.pallas_call(
        gat_project_kernel,
        out_shape=jax.ShapeDtypeStruct((bn_pad, d), jnp.float32),
        grid=(bn_pad // tm,),
        in_specs=[pl.BlockSpec((tm, d), lambda i: (i, 0)),
                  pl.BlockSpec((d, d), lambda i: (0, 0))],
        out_specs=pl.BlockSpec((tm, d), lambda i: (i, 0)),
        compiler_params=pltpu.CompilerParams(dimension_semantics=("parallel",)),
    )(h, W)

    need = 4 * (6 * tm * tk + 12 * (tm + tk) * d)
    gat = pl.pallas_call(
        functools.partial(gat_flash_kernel, bn=bn),
        out_shape=jax.ShapeDtypeStruct((bn_pad, d), jnp.float32),
        grid=(bn_pad // tm, bn_pad // tk),
        in_specs=[pl.BlockSpec((tm, d), lambda i, k: (i, 0)),
                  pl.BlockSpec((tk, d), lambda i, k: (k, 0),
                               pipeline_mode=pl.Buffered(3)),
                  pl.BlockSpec((d, 1), lambda i, k: (0, 0)),
                  pl.BlockSpec((1, d), lambda i, k: (0, 0))],
        out_specs=pl.BlockSpec((tm, d), lambda i, k: (i, 0)),
        scratch_shapes=[pltpu.VMEM((tm, 1), jnp.float32),   # running max
                        pltpu.VMEM((tm, 1), jnp.float32),   # running sum
                        pltpu.VMEM((tm, 1), jnp.float32),   # s1 (row scores)
                        pltpu.VMEM((tm, d), jnp.float32)],  # accumulator
        compiler_params=pltpu.CompilerParams(
            dimension_semantics=("parallel", "arbitrary"),
            vmem_limit_bytes=_vmem_limit(need)),
    )(wh, wh, a1, a2t)
    return gat[:bn]


# --------------------------------------------------------------------------
# Large-shape path, kernel 3: AdditiveAttention over a slab of batch rows.
# --------------------------------------------------------------------------
def additive_attn_kernel(x_ref, lw_ref, lb_ref, qvt_ref, o_ref):
    o_ref[...] = _additive_attention_block(
        x_ref[...], lw_ref[...], lb_ref[...], qvt_ref[...])


def additive_attention_forward(x, lw, lb, qvt):
    b, n, d = x.shape
    q = lw.shape[1]
    bt = _slab(b)
    need = 4 * (6 * bt * n * d + 4 * bt * n * q + 4 * bt * d)
    return pl.pallas_call(
        additive_attn_kernel,
        out_shape=jax.ShapeDtypeStruct((b, d), jnp.float32),
        grid=(b // bt,),
        in_specs=[pl.BlockSpec((bt, n, d), lambda i: (i, 0, 0)),
                  pl.BlockSpec((d, q), lambda i: (0, 0)),
                  pl.BlockSpec((1, q), lambda i: (0, 0)),
                  pl.BlockSpec((1, q), lambda i: (0, 0))],
        out_specs=pl.BlockSpec((bt, d), lambda i: (i, 0)),
        compiler_params=pltpu.CompilerParams(
            dimension_semantics=("parallel",),
            vmem_limit_bytes=_vmem_limit(need)),
    )(x, lw, lb, qvt)


# --------------------------------------------------------------------------
# Full UserEncoder forward.
# --------------------------------------------------------------------------
@jax.jit
def user_encoder_forward(user_vector, params):
    b, n, d = user_vector.shape
    bn = b * n
    h = user_vector.reshape(bn, d)
    a1 = params["gat_a"][:d]              # (D, 1)
    a2t = params["gat_a"][d:].T           # (1, D)
    lw = params["lin_w"].T                # (D, Q)
    lb = params["lin_b"].reshape(1, -1)   # (1, Q)
    qvt = params["qv"].T                  # (1, Q)
    # TODO(synk): torch.sparse adjacency branch not implemented; the module's dense
    # all-ones adjacency makes the -9e15 mask a provable no-op, so it is dropped.
    # TODO(synk): num_clicked_news not a multiple of 8 relies on Mosaic's general
    # reshape relayout inside the kernels; pad N to a multiple of 8 for best results.
    if bn <= FUSED_BN_LIMIT:
        return _fused_forward(h, params["gat_W"], a1, a2t, lw, lb, qvt, b, n)
    gat = _gat_forward_large(h, params["gat_W"], a1, a2t).reshape(b, n, d)
    return additive_attention_forward(gat, lw, lb, qvt)


# --------------------------------------------------------------------------
# Pure-JAX reference (mirrors the PyTorch forward) for verification.
# --------------------------------------------------------------------------
def reference_forward(user_vector, params):
    b, n, d = user_vector.shape
    h = user_vector.reshape(b * n, d)
    adj = jnp.ones((b * n, b * n), jnp.float32)
    wh = h @ params["gat_W"]
    wh1 = wh @ params["gat_a"][:d]
    wh2 = wh @ params["gat_a"][d:]
    e = wh1 + wh2.T
    e = jnp.where(e > 0, e, LEAKY_ALPHA * e)
    attn = jax.nn.softmax(jnp.where(adj > 0, e, jnp.float32(-9e15)), axis=1)
    hp = attn @ wh
    gat = jnp.where(hp > 0, hp, jnp.exp(hp) - 1.0).reshape(b, n, d)
    temp = jnp.tanh(gat @ params["lin_w"].T + params["lin_b"])
    cw = jax.nn.softmax(jnp.einsum("bnq,qo->bno", temp, params["qv"]), axis=1)
    return jnp.sum(gat * cw, axis=1)


def xavier_uniform(key, shape, gain=1.0):
    fan_in, fan_out = shape[0], shape[1]
    limit = gain * (6.0 / (fan_in + fan_out)) ** 0.5
    return jax.random.uniform(key, shape, jnp.float32, -limit, limit)


if __name__ == "__main__":
    # config: word_embedding_dim=32, query_vector_dim=16; batch=2, clicked_news=8
    B, N, D, Q = 2, 8, 32, 16
    keys = jax.random.split(jax.random.PRNGKey(0), 7)
    params = dict(
        gat_W=xavier_uniform(keys[0], (D, D), gain=1.414),        # GAT W
        gat_a=xavier_uniform(keys[1], (2 * D, 1), gain=1.414),    # GAT a
        lin_w=xavier_uniform(keys[2], (Q, D)),                    # Linear(D -> Q) weight
        lin_b=jax.random.uniform(keys[3], (Q,), jnp.float32, -0.1, 0.1),
        qv=xavier_uniform(keys[4], (Q, 1)),                       # query_vector
    )

    # 1) Shipped shape -> single fused VMEM-resident kernel.
    user_vector = jax.random.normal(keys[5], (B, N, D), jnp.float32)
    out = jax.block_until_ready(user_encoder_forward(user_vector, params))
    ref = reference_forward(user_vector, params)
    assert out.shape == (B, D), out.shape
    if not jnp.allclose(out, ref, atol=1e-2, rtol=1e-2):
        raise AssertionError(
            f"fused path mismatch: max abs err = {jnp.max(jnp.abs(out - ref))}")

    # 2) Larger, ragged shape -> projection + flash-GAT + additive kernels.
    #    BN = 1280 -> padded to 1536, grid (3, 3): exercises padding/masking,
    #    megacore row-parallelism and the bf16 MXU path (hence looser tolerance).
    B2, N2 = 4, 320
    user_vector2 = jax.random.normal(keys[6], (B2, N2, D), jnp.float32)
    out2 = jax.block_until_ready(user_encoder_forward(user_vector2, params))
    ref2 = reference_forward(user_vector2, params)
    assert out2.shape == (B2, D), out2.shape
    if not jnp.allclose(out2, ref2, atol=3e-2, rtol=3e-2):
        raise AssertionError(
            f"flash path mismatch: max abs err = {jnp.max(jnp.abs(out2 - ref2))}")

    print("KERNEL_OK")
</pallas_src>

<mosaic_0001>
module attributes {stable_mosaic.version = 11 : i64} {
  func.func @fused_user_encoder_kernel(%arg0: i32, %arg1: memref<16x32xf32, #tpu.memory_space<vmem>>, %arg2: memref<32x32xf32, #tpu.memory_space<vmem>>, %arg3: memref<32x1xf32, #tpu.memory_space<vmem>>, %arg4: memref<1x32xf32, #tpu.memory_space<vmem>>, %arg5: memref<32x16xf32, #tpu.memory_space<vmem>>, %arg6: memref<1x16xf32, #tpu.memory_space<vmem>>, %arg7: memref<1x16xf32, #tpu.memory_space<vmem>>, %arg8: memref<2x32xf32, #tpu.memory_space<vmem>>) attributes {dimension_semantics = [#tpu.dimension_semantics<arbitrary>], iteration_bounds = array<i64: 1>, scalar_prefetch = 0 : i64, scratch_operands = 0 : i64, tpu.core_type = #tpu.core_type<tc>, window_params = [{pipeline_mode = #tpu.pipeline_mode<synchronous>, transform_indices = @transform_0, window_bounds = array<i64: 16, 32>}, {pipeline_mode = #tpu.pipeline_mode<synchronous>, transform_indices = @transform_1, window_bounds = array<i64: 32, 32>}, {pipeline_mode = #tpu.pipeline_mode<synchronous>, transform_indices = @transform_2, window_bounds = array<i64: 32, 1>}, {pipeline_mode = #tpu.pipeline_mode<synchronous>, transform_indices = @transform_3, window_bounds = array<i64: 1, 32>}, {pipeline_mode = #tpu.pipeline_mode<synchronous>, transform_indices = @transform_4, window_bounds = array<i64: 32, 16>}, {pipeline_mode = #tpu.pipeline_mode<synchronous>, transform_indices = @transform_5, window_bounds = array<i64: 1, 16>}, {pipeline_mode = #tpu.pipeline_mode<synchronous>, transform_indices = @transform_6, window_bounds = array<i64: 1, 16>}, {pipeline_mode = #tpu.pipeline_mode<synchronous>, transform_indices = @transform_7, window_bounds = array<i64: 2, 32>}]} {
    %c0 = arith.constant 0 : index
    %c0_0 = arith.constant 0 : index
    %0 = vector.load %arg1[%c0, %c0_0] : memref<16x32xf32, #tpu.memory_space<vmem>>, vector<16x32xf32>
    %c0_1 = arith.constant 0 : index
    %c0_2 = arith.constant 0 : index
    %1 = vector.load %arg2[%c0_1, %c0_2] : memref<32x32xf32, #tpu.memory_space<vmem>>, vector<32x32xf32>
    %cst = arith.constant dense<0.000000e+00> : vector<16x32xf32>
    %2 = tpu.matmul %0, %1, %cst {dimension_numbers = #tpu.dot_dimension_numbers<[1], [0], [0], [1], [0, 0, 1, 1], [], []>} : vector<16x32xf32>, vector<32x32xf32>, vector<16x32xf32> -> vector<16x32xf32>
    %c0_3 = arith.constant 0 : index
    %c0_4 = arith.constant 0 : index
    %3 = vector.load %arg3[%c0_3, %c0_4] : memref<32x1xf32, #tpu.memory_space<vmem>>, vector<32x1xf32>
    %cst_5 = arith.constant dense<0.000000e+00> : vector<16x1xf32>
    %4 = tpu.matmul %2, %3, %cst_5 {dimension_numbers = #tpu.dot_dimension_numbers<[1], [0], [0], [1], [0, 0, 1, 1], [], []>} : vector<16x32xf32>, vector<32x1xf32>, vector<16x1xf32> -> vector<16x1xf32>
    %c0_6 = arith.constant 0 : index
    %c0_7 = arith.constant 0 : index
    %5 = vector.load %arg4[%c0_6, %c0_7] : memref<1x32xf32, #tpu.memory_space<vmem>>, vector<1x32xf32>
    %cst_8 = arith.constant dense<0.000000e+00> : vector<1x16xf32>
    %6 = tpu.matmul %5, %2, %cst_8 {dimension_numbers = #tpu.dot_dimension_numbers<[1], [1], [0], [0], [0, 0, 1, 0], [], []>} : vector<1x32xf32>, vector<16x32xf32>, vector<1x16xf32> -> vector<1x16xf32>
    %7 = vector.broadcast %4 : vector<16x1xf32> to vector<16x16xf32>
    %8 = vector.broadcast %6 : vector<1x16xf32> to vector<16x16xf32>
    %9 = arith.addf %7, %8 : vector<16x16xf32>
    %cst_9 = arith.constant 2.000000e-01 : f32
    %10 = vector.broadcast %cst_9 : f32 to vector<16x16xf32>
    %11 = arith.mulf %10, %9 : vector<16x16xf32>
    %12 = arith.maximumf %9, %11 : vector<16x16xf32>
    %cst_10 = arith.constant dense<0xFF800000> : vector<16xf32>
    %13 = vector.multi_reduction <maximumf>, %12, %cst_10 [1] : vector<16x16xf32> to vector<16xf32>
    %14 = vector.shape_cast %13 : vector<16xf32> to vector<16x1xf32>
    %15 = vector.broadcast %14 : vector<16x1xf32> to vector<16x16xf32>
    %16 = arith.subf %12, %15 : vector<16x16xf32>
    %17 = math.exp %16 : vector<16x16xf32>
    %cst_11 = arith.constant dense<0.000000e+00> : vector<16xf32>
    %18 = vector.multi_reduction <add>, %17, %cst_11 [1] : vector<16x16xf32> to vector<16xf32>
    %19 = vector.shape_cast %18 : vector<16xf32> to vector<16x1xf32>
    %20 = tpu.reciprocal %19 {approx = true} : vector<16x1xf32> -> vector<16x1xf32>
    %21 = vector.broadcast %20 : vector<16x1xf32> to vector<16x16xf32>
    %22 = arith.mulf %17, %21 : vector<16x16xf32>
    %cst_12 = arith.constant dense<0.000000e+00> : vector<16x32xf32>
    %23 = tpu.matmul %22, %2, %cst_12 {dimension_numbers = #tpu.dot_dimension_numbers<[1], [0], [0], [1], [0, 0, 1, 1], [], []>} : vector<16x16xf32>, vector<16x32xf32>, vector<16x32xf32> -> vector<16x32xf32>
    %cst_13 = arith.constant 0.000000e+00 : f32
    %24 = vector.broadcast %cst_13 : f32 to vector<16x32xf32>
    %25 = arith.cmpf ogt, %23, %24 : vector<16x32xf32>
    %26 = math.exp %23 : vector<16x32xf32>
    %cst_14 = arith.constant 1.000000e+00 : f32
    %27 = vector.broadcast %cst_14 : f32 to vector<16x32xf32>
    %28 = arith.subf %26, %27 : vector<16x32xf32>
    %29 = arith.select %25, %23, %28 : vector<16x32xi1>, vector<16x32xf32>
    %30 = vector.shape_cast %29 : vector<16x32xf32> to vector<2x8x32xf32>
    %c0_15 = arith.constant 0 : index
    %c0_16 = arith.constant 0 : index
    %31 = vector.load %arg5[%c0_15, %c0_16] : memref<32x16xf32, #tpu.memory_space<vmem>>, vector<32x16xf32>
    %c0_17 = arith.constant 0 : index
    %c0_18 = arith.constant 0 : index
    %32 = vector.load %arg6[%c0_17, %c0_18] : memref<1x16xf32, #tpu.memory_space<vmem>>, vector<1x16xf32>
    %c0_19 = arith.constant 0 : index
    %c0_20 = arith.constant 0 : index
    %33 = vector.load %arg7[%c0_19, %c0_20] : memref<1x16xf32, #tpu.memory_space<vmem>>, vector<1x16xf32>
    %34 = vector.shape_cast %30 : vector<2x8x32xf32> to vector<16x32xf32>
    %cst_21 = arith.constant dense<0.000000e+00> : vector<16x16xf32>
    %35 = tpu.matmul %34, %31, %cst_21 {dimension_numbers = #tpu.dot_dimension_numbers<[1], [0], [0], [1], [0, 0, 1, 1], [], []>} : vector<16x32xf32>, vector<32x16xf32>, vector<16x16xf32> -> vector<16x16xf32>
    %36 = vector.broadcast %32 : vector<1x16xf32> to vector<16x16xf32>
    %37 = arith.addf %35, %36 : vector<16x16xf32>
    %38 = math.tanh %37 : vector<16x16xf32>
    %39 = vector.shape_cast %38 : vector<16x16xf32> to vector<2x8x16xf32>
    %40 = vector.shape_cast %33 : vector<1x16xf32> to vector<1x1x16xf32>
    %41 = vector.broadcast %40 : vector<1x1x16xf32> to vector<2x8x16xf32>
    %42 = arith.mulf %39, %41 : vector<2x8x16xf32>
    %cst_22 = arith.constant dense<0.000000e+00> : vector<2x8xf32>
    %43 = vector.multi_reduction <add>, %42, %cst_22 [2] : vector<2x8x16xf32> to vector<2x8xf32>
    %44 = vector.shape_cast %43 : vector<2x8xf32> to vector<2x8x1xf32>
    %cst_23 = arith.constant dense<0xFF800000> : vector<2x1xf32>
    %45 = vector.multi_reduction <maximumf>, %44, %cst_23 [1] : vector<2x8x1xf32> to vector<2x1xf32>
    %46 = vector.shape_cast %45 : vector<2x1xf32> to vector<2x1x1xf32>
    %47 = vector.broadcast %46 : vector<2x1x1xf32> to vector<2x8x1xf32>
    %48 = arith.subf %44, %47 : vector<2x8x1xf32>
    %49 = math.exp %48 : vector<2x8x1xf32>
    %cst_24 = arith.constant dense<0.000000e+00> : vector<2x1xf32>
    %50 = vector.multi_reduction <add>, %49, %cst_24 [1] : vector<2x8x1xf32> to vector<2x1xf32>
    %51 = vector.shape_cast %50 : vector<2x1xf32> to vector<2x1x1xf32>
    %52 = tpu.reciprocal %51 {approx = true} : vector<2x1x1xf32> -> vector<2x1x1xf32>
    %53 = vector.broadcast %52 : vector<2x1x1xf32> to vector<2x8x1xf32>
    %54 = arith.mulf %49, %53 : vector<2x8x1xf32>
    %55 = vector.broadcast %54 : vector<2x8x1xf32> to vector<2x8x32xf32>
    %56 = arith.mulf %30, %55 : vector<2x8x32xf32>
    %cst_25 = arith.constant dense<0.000000e+00> : vector<2x32xf32>
    %57 = vector.multi_reduction <add>, %56, %cst_25 [1] : vector<2x8x32xf32> to vector<2x32xf32>
    %c0_26 = arith.constant 0 : index
    %c0_27 = arith.constant 0 : index
    %58 = vector.load %arg8[%c0_26, %c0_27] : memref<2x32xf32, #tpu.memory_space<vmem>>, vector<2x32xf32>
    tpu.vector_store %arg8[%c0_26, %c0_27], %57 {strides = array<i32>} : memref<2x32xf32, #tpu.memory_space<vmem>>, vector<2x32xf32>,
    return
  }
  func.func @transform_0(%arg0: i32) -> (i32, i32) {
    %c0_i32 = arith.constant 0 : i32
    %c0_i32_0 = arith.constant 0 : i32
    %c0_i32_1 = arith.constant 0 : i32
    return %c0_i32, %c0_i32_0 : i32, i32
  }
  func.func @transform_1(%arg0: i32) -> (i32, i32) {
    %c0_i32 = arith.constant 0 : i32
    %c0_i32_0 = arith.constant 0 : i32
    %c0_i32_1 = arith.constant 0 : i32
    return %c0_i32, %c0_i32_0 : i32, i32
  }
  func.func @transform_2(%arg0: i32) -> (i32, i32) {
    %c0_i32 = arith.constant 0 : i32
    %c0_i32_0 = arith.constant 0 : i32
    %c0_i32_1 = arith.constant 0 : i32
    return %c0_i32, %c0_i32_0 : i32, i32
  }
  func.func @transform_3(%arg0: i32) -> (i32, i32) {
    %c0_i32 = arith.constant 0 : i32
    %c0_i32_0 = arith.constant 0 : i32
    %c0_i32_1 = arith.constant 0 : i32
    return %c0_i32, %c0_i32_0 : i32, i32
  }
  func.func @transform_4(%arg0: i32) -> (i32, i32) {
    %c0_i32 = arith.constant 0 : i32
    %c0_i32_0 = arith.constant 0 : i32
    %c0_i32_1 = arith.constant 0 : i32
    return %c0_i32, %c0_i32_0 : i32, i32
  }
  func.func @transform_5(%arg0: i32) -> (i32, i32) {
    %c0_i32 = arith.constant 0 : i32
    %c0_i32_0 = arith.constant 0 : i32
    %c0_i32_1 = arith.constant 0 : i32
    return %c0_i32, %c0_i32_0 : i32, i32
  }
  func.func @transform_6(%arg0: i32) -> (i32, i32) {
    %c0_i32 = arith.constant 0 : i32
    %c0_i32_0 = arith.constant 0 : i32
    %c0_i32_1 = arith.constant 0 : i32
    return %c0_i32, %c0_i32_0 : i32, i32
  }
  func.func @transform_7(%arg0: i32) -> (i32, i32) {
    %c0_i32 = arith.constant 0 : i32
    %c0_i32_0 = arith.constant 0 : i32
    %c0_i32_1 = arith.constant 0 : i32
    return %c0_i32, %c0_i32_0 : i32, i32
  }
}

</mosaic_0001>

<llo_original>
// kernel: user_encoder_forward.1
$region0: #{user_encoder_forward.1}
  #allocation0 [shape = 'u32[]', space=smem, size = 0x4, offset = 0x4, fixed_abs, tag = 'smem constant byte address 0x4 - core index']
  #allocation1 [shape = 'u32[72,128]{1,0:T(1,128)}', space=vmem, size = 0x9000, scoped, tag = 'internal scratch']
  %s0 = inlined_call_operand.vmem [shape: f32[16,32], index: 0, kind: input, shape index: {}]
  %s1 = inlined_call_operand.vmem [shape: f32[32,32], index: 1, kind: input, shape index: {}]
  %s2 = inlined_call_operand.vmem [shape: f32[32,1], index: 2, kind: input, shape index: {}]
  %s3 = inlined_call_operand.vmem [shape: f32[1,32], index: 3, kind: input, shape index: {}]
  %s4 = inlined_call_operand.vmem [shape: f32[32,16], index: 4, kind: input, shape index: {}]
  %s5 = inlined_call_operand.vmem [shape: f32[1,16], index: 5, kind: input, shape index: {}]
  %s6 = inlined_call_operand.vmem [shape: f32[1,16], index: 6, kind: input, shape index: {}]
  %s7 = inlined_call_operand.hbm [shape: f32[2,32], index: 7, kind: output, shape index: {}]
  %s8 = sld [smem:[#allocation0]]
  $region38: #{user_encoder_forward.1} parent=0
    _
  %s10 = ssub.s32 1, %s8
  %s11 = scalar_select 0, %s10, %s8
  $region1: #{user_encoder_forward.1} parent=0
    #allocation2 [shape = 'u8[1024]{0}', space=vmem, size = 0x400, scoped, tag = 'output window, operand 0, single buffered']
    #allocation3 [shape = 's32[1]{0}', space=sflag, size = 0x4, scoped, tag = 'scoped memory for user_encoder_forward.1']
    %12 = vsyncpa [#allocation3], 0
    // Predicated region
    $region2: #{user_encoder_forward.1} parent=1 // pred_check
      _
    $region3: #{user_encoder_forward.1} parent=1 // pred_check_branch
      %14 = sbr.rel (0) target = $region5
    $region4: #{user_encoder_forward.1} parent=1 // pred_region
      _
    $region5: #{user_encoder_forward.1} parent=1 // pred_fallthru
      _
    // Predicated region
    $region6: #{user_encoder_forward.1} parent=1 // pred_check
      _
    $region7: #{user_encoder_forward.1} parent=1 // pred_check_branch
      %16 = sbr.rel (0) target = $region9
    $region8: #{user_encoder_forward.1} parent=1 // pred_region
      _
    $region9: #{user_encoder_forward.1} parent=1 // pred_fallthru
      _
    // Predicated region
    $region10: #{user_encoder_forward.1} parent=1 // pred_check
      _
    $region11: #{user_encoder_forward.1} parent=1 // pred_check_branch
      %18 = sbr.rel (0) target = $region13
    $region12: #{user_encoder_forward.1} parent=1 // pred_region
      _
    $region13: #{user_encoder_forward.1} parent=1 // pred_fallthru
      _
    // Predicated region
    $region14: #{user_encoder_forward.1} parent=1 // pred_check
      _
    $region15: #{user_encoder_forward.1} parent=1 // pred_check_branch
      %20 = sbr.rel (0) target = $region17
    $region16: #{user_encoder_forward.1} parent=1 // pred_region
      _
    $region17: #{user_encoder_forward.1} parent=1 // pred_fallthru
      _
    // Predicated region
    $region18: #{user_encoder_forward.1} parent=1 // pred_check
      _
    $region19: #{user_encoder_forward.1} parent=1 // pred_check_branch
      %22 = sbr.rel (0) target = $region21
    $region20: #{user_encoder_forward.1} parent=1 // pred_region
      _
    $region21: #{user_encoder_forward.1} parent=1 // pred_fallthru
      _
    // Predicated region
    $region22: #{user_encoder_forward.1} parent=1 // pred_check
      _
    $region23: #{user_encoder_forward.1} parent=1 // pred_check_branch
      %24 = sbr.rel (0) target = $region25
    $region24: #{user_encoder_forward.1} parent=1 // pred_region
      _
    $region25: #{user_encoder_forward.1} parent=1 // pred_fallthru
      _
    // Predicated region
    $region26: #{user_encoder_forward.1} parent=1 // pred_check
      _
    $region27: #{user_encoder_forward.1} parent=1 // pred_check_branch
      %26 = sbr.rel (0) target = $region29
    $region28: #{user_encoder_forward.1} parent=1 // pred_region
      _
    $region29: #{user_encoder_forward.1} parent=1 // pred_fallthru
      _
    %v27 = vld [vmem:[%s0] sm:$0xff]
    %v28 = vld [vmem:[%s0 + $0x8] sm:$0xff]
    %v29 = vld [vmem:[%s1] sm:$0xff]
    %v30 = vld [vmem:[%s1 + $0x8] sm:$0xff]
    %v31 = vld [vmem:[%s1 + $0x10] sm:$0xff]
    %v32 = vld [vmem:[%s1 + $0x18] sm:$0xff]
    %vm33 = vcmask 261120
    %v35 = vsel %vm33, %v27, 0
    %v38 = vsel %vm33, %v28, 0
    %40 = vmatpush.msra.mxu0 0.0
    %41 = vmatpush.msra.mxu0 0.0
    %42 = vmatpush.msra.mxu0 0.0
    %43 = vmatpush.msra.mxu0 0.0
    %44 = vmatpush.msra.mxu0 0.0
    %45 = vmatpush.msra.mxu0 0.0
    %46 = vmatpush.msra.mxu0 0.0
    %47 = vmatpush.msra.mxu0 0.0
    %48 = vmatpush.msra.mxu0 0.0
    %49 = vmatpush.msra.mxu0 0.0
    %50 = vmatpush.msra.mxu0 0.0
    %51 = vmatpush.msra.mxu0 0.0
    %52 = vmatpush.msra.mxu0 %v32
    %53 = vmatpush.msra.mxu0 %v31
    %54 = vmatpush.msra.mxu0 %v30
    %55 = vmatpush.msra.mxu0 %v29
    %56 = vmatmul.f32.gmra.mxu0 %v35
    %v57 = vpop.f32.mrf.mxu0
    %v58 = vadd.f32 0.0, %v57
    %59 = vmatmul.f32.gmra.mxu0 %v38
    %v60 = vpop.f32.mrf.mxu0
    %v61 = vadd.f32 0.0, %v60
    %62 = vdwg.mxu0
    %v63 = vld [vmem:[%s2] sm:$0xff]
    %v64 = vld [vmem:[%s2 + $0x8] sm:$0xff]
    %v65 = vld [vmem:[%s2 + $0x10] sm:$0xff]
    %v66 = vld [vmem:[%s2 + $0x18] sm:$0xff]
    %v68 = vsel %vm33, %v58, 0
    %v71 = vsel %vm33, %v61, 0
    %73 = vmatpush.msra.mxu0 0.0
    %74 = vmatpush.msra.mxu0 0.0
    %75 = vmatpush.msra.mxu0 0.0
    %76 = vmatpush.msra.mxu0 0.0
    %77 = vmatpush.msra.mxu0 0.0
    %78 = vmatpush.msra.mxu0 0.0
    %79 = vmatpush.msra.mxu0 0.0
    %80 = vmatpush.msra.mxu0 0.0
    %81 = vmatpush.msra.mxu0 0.0
    %82 = vmatpush.msra.mxu0 0.0
    %83 = vmatpush.msra.mxu0 0.0
    %84 = vmatpush.msra.mxu0 0.0
    %85 = vmatpush.msra.mxu0 %v66
    %86 = vmatpush.msra.mxu0 %v65
    %87 = vmatpush.msra.mxu0 %v64
    %88 = vmatpush.msra.mxu0 %v63
    %89 = vmatmul.f32.gmra.mxu0 %v68
    %v90 = vpop.f32.mrf.mxu0
    %v91 = vadd.f32 0.0, %v90
    %92 = vmatmul.f32.gmra.mxu0 %v71
    %v93 = vpop.f32.mrf.mxu0
    %v94 = vadd.f32 0.0, %v93
    %95 = vdwg.mxu0
    %v96 = vld [vmem:[%s3] sm:$0x1]
    %v98 = vsel %vm33, %v96, 0
    %100 = vmatpush.xpose.msra.mxu0 0.0
    %101 = vmatpush.xpose.msra.mxu0 0.0
    %102 = vmatpush.xpose.msra.mxu0 0.0
    %103 = vmatpush.xpose.msra.mxu0 0.0
    %104 = vmatpush.xpose.msra.mxu0 0.0
    %105 = vmatpush.xpose.msra.mxu0 0.0
    %106 = vmatpush.xpose.msra.mxu0 0.0
    %107 = vmatpush.xpose.msra.mxu0 0.0
    %108 = vmatpush.xpose.msra.mxu0 0.0
    %109 = vmatpush.xpose.msra.mxu0 0.0
    %110 = vmatpush.xpose.msra.mxu0 0.0
    %111 = vmatpush.xpose.msra.mxu0 0.0
    %112 = vmatpush.xpose.msra.mxu0 0.0
    %113 = vmatpush.xpose.msra.mxu0 0.0
    %114 = vmatpush.xpose.msra.mxu0 %v71
    %115 = vmatpush.xpose.msra.mxu0 %v68
    %116 = vmatmul.f32.gmra.mxu0 %v98
    %v117 = vpop.f32.mrf.mxu0
    %v118 = vadd.f32 0.0, %v117
    %119 = vdwg.mxu0
    %121 = vset.pattern.permute.xlu0 0
    %122 = vperm.xlu0 %121, %v91
    %v123 = vpop.permute.xlu0 %122
    %126 = vset.pattern.permute.xlu0 0
    %127 = vperm.xlu0 %126, %v94
    %v128 = vpop.permute.xlu0 %127
    %v130 = vperm.slane %v118, 0
    %v131 = vadd.f32 %v123, %v130
    %v132 = vadd.f32 %v128, %v130
    %v133 = vmul.f32 %v131, 0.2
    %v134 = vmul.f32 %v132, 0.2
    %v135 = vmax.f32 %v131, %v133
    %v136 = vmax.f32 %v132, %v134
    %vm137 = vcmask 130048
    %v138 = vsel %vm137, %v135, -inf
    %139 = vmax.xlane.f32.xlu0 %v138
    %v140 = vpop.xlane.xlu0 %139
    %v141 = vsel %vm137, %v136, -inf
    %142 = vmax.xlane.f32.xlu0 %v141
    %v143 = vpop.xlane.xlu0 %142
    %v144 = vsub.f32 %v135, %v140
    %v145 = vsub.f32 %v136, %v143
    %v146 = vmul.f32 %v144, 1.442695
    %v147 = vpow.pop %v146
    %v148 = vmul.f32 %v145, 1.442695
    %v149 = vpow.pop %v148
    %v150 = vsel %vm137, %v147, 0.0
    %151 = vadd.xlane.f32.xlu0 %v150
    %v152 = vpop.xlane.xlu0 %151
    %v153 = vsel %vm137, %v149, 0.0
    %154 = vadd.xlane.f32.xlu0 %v153
    %v155 = vpop.xlane.xlu0 %154
    %v156 = vrcp.pop %v152
    %v157 = vrcp.pop %v155
    %v158 = vmul.f32 %v147, %v156
    %v159 = vmul.f32 %v149, %v157
    %v161 = vsel %vm137, %v158, 0
    %v164 = vsel %vm137, %v159, 0
    %166 = vmatpush.msra.mxu0 0.0
    %167 = vmatpush.msra.mxu0 0.0
    %168 = vmatpush.msra.mxu0 0.0
    %169 = vmatpush.msra.mxu0 0.0
    %170 = vmatpush.msra.mxu0 0.0
    %171 = vmatpush.msra.mxu0 0.0
    %172 = vmatpush.msra.mxu0 0.0
    %173 = vmatpush.msra.mxu0 0.0
    %174 = vmatpush.msra.mxu0 0.0
    %175 = vmatpush.msra.mxu0 0.0
    %176 = vmatpush.msra.mxu0 0.0
    %177 = vmatpush.msra.mxu0 0.0
    %178 = vmatpush.msra.mxu0 0.0
    %179 = vmatpush.msra.mxu0 0.0
    %180 = vmatpush.msra.mxu0 %v61
    %181 = vmatpush.msra.mxu0 %v58
    %182 = vmatmul.f32.gmra.mxu0 %v161
    %v183 = vpop.f32.mrf.mxu0
    %v184 = vadd.f32 0.0, %v183
    %185 = vmatmul.f32.gmra.mxu0 %v164
    %v186 = vpop.f32.mrf.mxu0
    %v187 = vadd.f32 0.0, %v186
    %188 = vdwg.mxu0
    %vm189 = vcmp.gt.f32.partialorder %v184, 0.0
    %vm190 = vcmp.gt.f32.partialorder %v187, 0.0
    %v191 = vmul.f32 %v184, 1.442695
    %v192 = vpow.pop %v191
    %v193 = vmul.f32 %v187, 1.442695
    %v194 = vpow.pop %v193
    %v195 = vsub.f32 %v192, 1.0
    %v196 = vsub.f32 %v194, 1.0
    %v197 = vsel %vm189, %v184, %v195
    %v198 = vsel %vm190, %v187, %v196
    %v199 = vld [vmem:[%s4] sm:$0xff]
    %v200 = vld [vmem:[%s4 + $0x8] sm:$0xff]
    %v201 = vld [vmem:[%s4 + $0x10] sm:$0xff]
    %v202 = vld [vmem:[%s4 + $0x18] sm:$0xff]
    %v203 = vld [vmem:[%s5] sm:$0x1]
    %v204 = vld [vmem:[%s6] sm:$0x1]
    %v206 = vperm.slane %v203, 0
    %v209 = vsel %vm33, %v197, 0
    %v212 = vsel %vm33, %v198, 0
    %214 = vmatpush.msra.mxu0 0.0
    %215 = vmatpush.msra.mxu0 0.0
    %216 = vmatpush.msra.mxu0 0.0
    %217 = vmatpush.msra.mxu0 0.0
    %218 = vmatpush.msra.mxu0 0.0
    %219 = vmatpush.msra.mxu0 0.0
    %220 = vmatpush.msra.mxu0 0.0
    %221 = vmatpush.msra.mxu0 0.0
    %222 = vmatpush.msra.mxu0 0.0
    %223 = vmatpush.msra.mxu0 0.0
    %224 = vmatpush.msra.mxu0 0.0
    %225 = vmatpush.msra.mxu0 0.0
    %226 = vmatpush.msra.mxu0 %v202
    %227 = vmatpush.msra.mxu0 %v201
    %228 = vmatpush.msra.mxu0 %v200
    %229 = vmatpush.msra.mxu0 %v199
    %230 = vmatmul.f32.gmra.mxu0 %v209
    %v231 = vpop.f32.mrf.mxu0
    %v232 = vadd.f32 %v206, %v231
    %233 = vmatmul.f32.gmra.mxu0 %v212
    %v234 = vpop.f32.mrf.mxu0
    %v235 = vadd.f32 %v206, %v234
    %236 = vdwg.mxu0
    %v237 = vtanh.pop %v232
    %v238 = vtanh.pop %v235
    %v240 = vperm.slane %v204, 0
    %v242 = vmul.f32 %v237, %v240
    %v243 = vmul.f32 %v238, %v240
    %v244 = vsel %vm137, %v242, 0.0
    %245 = vadd.xlane.f32.xlu0 %v244
    %v246 = vpop.xlane.xlu0 %245
    %v247 = vsel %vm137, %v243, 0.0
    %248 = vadd.xlane.f32.xlu0 %v247
    %v249 = vpop.xlane.xlu0 %248
    %v250 = vrot.slane %v246, 4
    %v251 = vmax.f32 %v246, %v250
    %v252 = vrot.slane %v251, 2
    %v253 = vmax.f32 %v251, %v252
    %v254 = vrot.slane %v253, 1
    %v255 = vmax.f32 %v253, %v254
    %v256 = vrot.slane %v249, 4
    %v257 = vmax.f32 %v249, %v256
    %v258 = vrot.slane %v257, 2
    %v259 = vmax.f32 %v257, %v258
    %v260 = vrot.slane %v259, 1
    %v261 = vmax.f32 %v259, %v260
    %v262 = vsub.f32 %v246, %v255
    %v263 = vsub.f32 %v249, %v261
    %v264 = vmul.f32 %v262, 1.442695
    %v265 = vpow.pop %v264
    %v266 = vmul.f32 %v263, 1.442695
    %v267 = vpow.pop %v266
    %v268 = vrot.slane %v265, 4
    %v269 = vadd.f32 %v265, %v268
    %v270 = vrot.slane %v269, 2
    %v271 = vadd.f32 %v269, %v270
    %v272 = vrot.slane %v271, 1
    %v273 = vadd.f32 %v271, %v272
    %v274 = vrot.slane %v267, 4
    %v275 = vadd.f32 %v267, %v274
    %v276 = vrot.slane %v275, 2
    %v277 = vadd.f32 %v275, %v276
    %v278 = vrot.slane %v277, 1
    %v279 = vadd.f32 %v277, %v278
    %v280 = vrcp.pop %v273
    %v281 = vrcp.pop %v279
    %v282 = vmul.f32 %v265, %v280
    %v283 = vmul.f32 %v267, %v281
    %v284 = vmul.f32 %v197, %v282
    %v285 = vmul.f32 %v198, %v283
    %v286 = vsel %vm33, %v284, 0.0
    %v287 = vrot.slane %v286, 4
    %v288 = vadd.f32 %v286, %v287
    %v289 = vrot.slane %v288, 2
    %v290 = vadd.f32 %v288, %v289
    %v291 = vrot.slane %v290, 1
    %v292 = vadd.f32 %v290, %v291
    %v293 = vsel %vm33, %v285, 0.0
    %v294 = vrot.slane %v293, 4
    %v295 = vadd.f32 %v293, %v294
    %v296 = vrot.slane %v295, 2
    %v297 = vadd.f32 %v295, %v296
    %v298 = vrot.slane %v297, 1
    %v299 = vadd.f32 %v297, %v298
    %vm302 = vcmask 1041409
    %v303 = vsel %vm302, %v299, %v292
    %vm305 = vcmask 254976
    %306 = vst.msk [vmem:[#allocation2] sm:$0x3] %vm305, %v303
    // Predicated region
    $region30: #{user_encoder_forward.1} parent=1 // pred_check
      _
    $region31: #{user_encoder_forward.1} parent=1 // pred_check_branch
      %308 = sbr.rel (0) target = $region33
    $region32: #{user_encoder_forward.1} parent=1 // pred_region
      %310 = vsyncadd [#allocation3], 0
      %s312 = sshll.u32 [#allocation2], 4
      %s313 = int_to_ptr.vmem [resolvable:$true] %s312
      %s314 = sshll.u32 %s7, 4
      %s315 = int_to_ptr.hbm [resolvable:$true] %s314
      %317 = dma.vmem_to_hbm [thread:$0]  %s313, 32, %s315, [#allocation3]
    $region33: #{user_encoder_forward.1} parent=1 // pred_fallthru
      _
    // Predicated region
    $region34: #{user_encoder_forward.1} parent=1 // pred_check
      _
    $region35: #{user_encoder_forward.1} parent=1 // pred_check_branch
      %319 = sbr.rel (0) target = $region37
    $region36: #{user_encoder_forward.1} parent=1 // pred_region
      %321 = dma.done [#allocation3], 32
    $region37: #{user_encoder_forward.1} parent=1 // pred_fallthru
      _
    %322 = vsyncpa [#allocation3], 1

</llo_original>
